<compile_context>
chip_gen: v5e
topology: v5e:2x2
jax: 0.10.0
libtpu: 0.0.40
codegen_flags: <defaults>
</compile_context>

<pallas_src>
import functools
import math

import jax
import jax.numpy as jnp
from jax.experimental import pallas as pl
from jax.experimental.pallas import tpu as pltpu


def _split_kernel(feature_dims, x_ref, *out_refs):
    # Static lane-range copies inside VMEM; offsets are Python ints.
    offset = 0
    for out_ref, fdim in zip(out_refs, feature_dims):
        out_ref[...] = x_ref[:, offset:offset + fdim]
        offset += fdim


def _round_up(v, m):
    return -(-v // m) * m


def split_pallas(x, feature_dims):
    """Equivalent of Split(feature_dims)(x): list of contiguous last-axis slices."""
    feature_dims = tuple(int(d) for d in feature_dims)
    total = sum(feature_dims)
    F = x.shape[-1]
    assert F >= total, "feature_dims exceed last-axis size"

    lead_shape = x.shape[:-1]
    R = int(math.prod(lead_shape)) if lead_shape else 1
    x2 = x.reshape(R, F)

    itemsize = jnp.dtype(x.dtype).itemsize
    # Sublane count per dtype: 8 for 4-byte, 16 for 2-byte, 32 for 1-byte.
    sublane = max(8, 32 // max(itemsize, 1))

    # Per-row VMEM footprint with 128-lane padding (narrow outputs pad up).
    lane_pad = lambda f: _round_up(f, 128)
    bytes_per_row = (lane_pad(F) + sum(lane_pad(f) for f in feature_dims)) * itemsize

    # ~12 MiB per buffer set -> ~24 MiB with double buffering: safe on
    # v7x (64 MiB physical / 32 MiB scoped) and under the limit we set below.
    budget = 12 * 1024 * 1024
    tile_r = max(sublane, (budget // bytes_per_row) // sublane * sublane)
    tile_r = min(tile_r, 2048)                       # diminishing returns past this
    tile_r = min(tile_r, _round_up(R, sublane))      # don't exceed (rounded) row count

    grid = (pl.cdiv(R, tile_r),)

    in_specs = [pl.BlockSpec((tile_r, F), lambda r: (r, 0))]
    out_specs = tuple(
        pl.BlockSpec((tile_r, f), lambda r: (r, 0)) for f in feature_dims
    )
    out_shapes = tuple(
        jax.ShapeDtypeStruct((R, f), x.dtype) for f in feature_dims
    )

    kernel = functools.partial(_split_kernel, feature_dims)

    bytes_accessed = R * F * itemsize + R * total * itemsize
    outs = pl.pallas_call(
        kernel,
        grid=grid,
        in_specs=in_specs,
        out_specs=out_specs,
        out_shape=out_shapes,
        compiler_params=pltpu.CompilerParams(
            dimension_semantics=("parallel",),
            vmem_limit_bytes=32 * 1024 * 1024,
        ),
        cost_estimate=pl.CostEstimate(
            flops=0, transcendentals=0, bytes_accessed=bytes_accessed
        ),
    )(x2)

    return [o.reshape(lead_shape + (f,)) for o, f in zip(outs, feature_dims)]


if __name__ == "__main__":
    key = jax.random.PRNGKey(0)
    feature_dims = (8, 16, 8)                      # sums to 32
    x = jax.random.normal(key, (2, 8, 32), dtype=jnp.float32)

    outs = split_pallas(x, feature_dims)
    outs = [jax.block_until_ready(o) for o in outs]

    # correctness check against plain-JAX slicing (same semantics as PyTorch)
    off = 0
    for o, d in zip(outs, feature_dims):
        ref = x[..., off:off + d]
        assert o.shape == ref.shape and o.dtype == ref.dtype
        assert jnp.allclose(o, ref)
        off += d

    print("KERNEL_OK")
</pallas_src>

<mosaic_0001>
module attributes {stable_mosaic.version = 11 : i64} {
  func.func @_split_kernel(%arg0: i32, %arg1: memref<16x32xf32, #tpu.memory_space<vmem>>, %arg2: memref<16x8xf32, #tpu.memory_space<vmem>>, %arg3: memref<16x16xf32, #tpu.memory_space<vmem>>, %arg4: memref<16x8xf32, #tpu.memory_space<vmem>>) attributes {dimension_semantics = [#tpu.dimension_semantics<parallel>], iteration_bounds = array<i64: 1>, scalar_prefetch = 0 : i64, scratch_operands = 0 : i64, tpu.core_type = #tpu.core_type<tc>, window_params = [{transform_indices = @transform_0, window_bounds = array<i64: 16, 32>}, {transform_indices = @transform_1, window_bounds = array<i64: 16, 8>}, {transform_indices = @transform_2, window_bounds = array<i64: 16, 16>}, {transform_indices = @transform_3, window_bounds = array<i64: 16, 8>}]} {
    %c0 = arith.constant 0 : index
    %c0_0 = arith.constant 0 : index
    %0 = vector.load %arg1[%c0, %c0_0] : memref<16x32xf32, #tpu.memory_space<vmem>>, vector<16x8xf32>
    %c0_1 = arith.constant 0 : index
    %c0_2 = arith.constant 0 : index
    %1 = vector.load %arg2[%c0_1, %c0_2] : memref<16x8xf32, #tpu.memory_space<vmem>>, vector<16x8xf32>
    tpu.vector_store %arg2[%c0_1, %c0_2], %0 {strides = array<i32>} : memref<16x8xf32, #tpu.memory_space<vmem>>, vector<16x8xf32>,
    %c0_3 = arith.constant 0 : index
    %c8 = arith.constant 8 : index
    %2 = vector.load %arg1[%c0_3, %c8] : memref<16x32xf32, #tpu.memory_space<vmem>>, vector<16x16xf32>
    %c0_4 = arith.constant 0 : index
    %c0_5 = arith.constant 0 : index
    %3 = vector.load %arg3[%c0_4, %c0_5] : memref<16x16xf32, #tpu.memory_space<vmem>>, vector<16x16xf32>
    tpu.vector_store %arg3[%c0_4, %c0_5], %2 {strides = array<i32>} : memref<16x16xf32, #tpu.memory_space<vmem>>, vector<16x16xf32>,
    %c0_6 = arith.constant 0 : index
    %c24 = arith.constant 24 : index
    %4 = vector.load %arg1[%c0_6, %c24] : memref<16x32xf32, #tpu.memory_space<vmem>>, vector<16x8xf32>
    %c0_7 = arith.constant 0 : index
    %c0_8 = arith.constant 0 : index
    %5 = vector.load %arg4[%c0_7, %c0_8] : memref<16x8xf32, #tpu.memory_space<vmem>>, vector<16x8xf32>
    tpu.vector_store %arg4[%c0_7, %c0_8], %4 {strides = array<i32>} : memref<16x8xf32, #tpu.memory_space<vmem>>, vector<16x8xf32>,
    return
  }
  func.func @transform_0(%arg0: i32) -> (i32, i32) {
    %c0_i32 = arith.constant 0 : i32
    %c0_i32_0 = arith.constant 0 : i32
    return %arg0, %c0_i32 : i32, i32
  }
  func.func @transform_1(%arg0: i32) -> (i32, i32) {
    %c0_i32 = arith.constant 0 : i32
    %c0_i32_0 = arith.constant 0 : i32
    return %arg0, %c0_i32 : i32, i32
  }
  func.func @transform_2(%arg0: i32) -> (i32, i32) {
    %c0_i32 = arith.constant 0 : i32
    %c0_i32_0 = arith.constant 0 : i32
    return %arg0, %c0_i32 : i32, i32
  }
  func.func @transform_3(%arg0: i32) -> (i32, i32) {
    %c0_i32 = arith.constant 0 : i32
    %c0_i32_0 = arith.constant 0 : i32
    return %arg0, %c0_i32 : i32, i32
  }
}

</mosaic_0001>

<llo_original>
// kernel: tpu_custom_call.1
$region0: #{tpu_custom_call.1}
  #allocation0 [shape = 'u32[]', space=smem, size = 0x4, offset = 0x4, fixed_abs, tag = 'smem constant byte address 0x4 - core index']
  #allocation1 [shape = 'u32[72,128]{1,0:T(1,128)}', space=vmem, size = 0x9000, scoped, tag = 'internal scratch']
  %s0 = inlined_call_operand.hbm [shape: f32[16,32], index: 0, kind: input, shape index: {}]
  %s1 = inlined_call_operand.vmem [shape: f32[16,8], index: 1, kind: output, shape index: {0}]
  %s2 = inlined_call_operand.hbm [shape: f32[16,16], index: 2, kind: output, shape index: {1}]
  %s3 = inlined_call_operand.vmem [shape: f32[16,8], index: 3, kind: output, shape index: {2}]
  %4 = xla_tuple %s1, %s2, %s3
  %s5 = sld [smem:[#allocation0]]
  $region34: #{tpu_custom_call.1} parent=0
    _
  %s7 = ssub.s32 1, %s5
  %s8 = scalar_select 0, %s7, %s5
  $region1: #{tpu_custom_call.1} parent=0
    #allocation2 [shape = 'u8[8192]{0}', space=vmem, size = 0x2000, scoped, tag = 'input window, operand 0, single buffered']
    #allocation3 [shape = 's32[1]{0}', space=sflag, size = 0x4, scoped, tag = 'scoped memory for tpu_custom_call.1']
    #allocation4 [shape = 's32[1]{0}', space=sflag, size = 0x4, scoped, tag = 'scoped memory for tpu_custom_call.1']
    #allocation5 [shape = 'u8[8192]{0}', space=vmem, size = 0x2000, scoped, tag = 'output window, operand 1, single buffered']
    %9 = vsyncpa [#allocation3], 0
    %10 = vsyncpa [#allocation4], 0
    // Predicated region
    $region2: #{tpu_custom_call.1} parent=1 // pred_check
      _
    $region3: #{tpu_custom_call.1} parent=1 // pred_check_branch
      %12 = sbr.rel (0) target = $region5
    $region4: #{tpu_custom_call.1} parent=1 // pred_region
      %14 = vsyncadd [#allocation3], 0
      %s15 = sshll.u32 %s0, 4
      %s16 = int_to_ptr.hbm [resolvable:$true] %s15
      %s17 = sshll.u32 [#allocation2], 4
      %s18 = int_to_ptr.vmem [resolvable:$true] %s17
      %23 = dma.hbm_to_vmem [thread:$0]  %s16, 256, %s18, [#allocation3], 128, 128, 8
    $region5: #{tpu_custom_call.1} parent=1 // pred_fallthru
      _
    // Predicated region
    $region6: #{tpu_custom_call.1} parent=1 // pred_check
      _
    $region7: #{tpu_custom_call.1} parent=1 // pred_check_branch
      %25 = sbr.rel (0) target = $region9
    $region8: #{tpu_custom_call.1} parent=1 // pred_region
      %27 = dma.done [#allocation3], 256
    $region9: #{tpu_custom_call.1} parent=1 // pred_fallthru
      _
    %v28 = vld [vmem:[#allocation2] sm:$0xff]
    %v29 = vld [vmem:[#allocation2 + $0x8] sm:$0xff]
    %vm30 = vcmask 64512
    %31 = vst.msk [vmem:[%s1] sm:$0xff] %vm30, %v28
    %32 = vst.msk [vmem:[%s1 + $0x8] sm:$0xff] %vm30, %v29
    %v33 = vld [vmem:[#allocation2] sm:$0xff]
    %v34 = vld [vmem:[#allocation2 + $0x8] sm:$0xff]
    %37 = vrot.lane.b32.xlu0 %v33, 120
    %v38 = vpop.permute.xlu0 %37
    %39 = vrot.lane.b32.xlu0 %v34, 120
    %v40 = vpop.permute.xlu0 %39
    %vm43 = vcmask 130048
    %44 = vst.msk [vmem:[#allocation5] sm:$0xff] %vm43, %v38
    %45 = vst.msk [vmem:[#allocation5 + $0x8] sm:$0xff] %vm43, %v40
    %v46 = vld [vmem:[#allocation2] sm:$0xff]
    %v47 = vld [vmem:[#allocation2 + $0x8] sm:$0xff]
    %50 = vrot.lane.b32.xlu0 %v46, 104
    %v51 = vpop.permute.xlu0 %50
    %52 = vrot.lane.b32.xlu0 %v47, 104
    %v53 = vpop.permute.xlu0 %52
    %56 = vst.msk [vmem:[%s3] sm:$0xff] %vm30, %v51
    %57 = vst.msk [vmem:[%s3 + $0x8] sm:$0xff] %vm30, %v53
    // Predicated region
    $region10: #{tpu_custom_call.1} parent=1 // pred_check
      _
    $region11: #{tpu_custom_call.1} parent=1 // pred_check_branch
      %59 = sbr.rel (0) target = $region13
    $region12: #{tpu_custom_call.1} parent=1 // pred_region
      _
    $region13: #{tpu_custom_call.1} parent=1 // pred_fallthru
      _
    // Predicated region
    $region14: #{tpu_custom_call.1} parent=1 // pred_check
      _
    $region15: #{tpu_custom_call.1} parent=1 // pred_check_branch
      %61 = sbr.rel (0) target = $region17
    $region16: #{tpu_custom_call.1} parent=1 // pred_region
      %63 = vsyncadd [#allocation4], 0
      %s64 = sshll.u32 [#allocation5], 4
      %s65 = int_to_ptr.vmem [resolvable:$true] %s64
      %s66 = sshll.u32 %s2, 4
      %s67 = int_to_ptr.hbm [resolvable:$true] %s66
      %72 = dma.vmem_to_hbm [thread:$0]  %s65, 256, %s67, [#allocation4], 128, 128, 8
    $region17: #{tpu_custom_call.1} parent=1 // pred_fallthru
      _
    // Predicated region
    $region18: #{tpu_custom_call.1} parent=1 // pred_check
      _
    $region19: #{tpu_custom_call.1} parent=1 // pred_check_branch
      %74 = sbr.rel (0) target = $region21
    $region20: #{tpu_custom_call.1} parent=1 // pred_region
      _
    $region21: #{tpu_custom_call.1} parent=1 // pred_fallthru
      _
    // Predicated region
    $region22: #{tpu_custom_call.1} parent=1 // pred_check
      _
    $region23: #{tpu_custom_call.1} parent=1 // pred_check_branch
      %76 = sbr.rel (0) target = $region25
    $region24: #{tpu_custom_call.1} parent=1 // pred_region
      _
    $region25: #{tpu_custom_call.1} parent=1 // pred_fallthru
      _
    // Predicated region
    $region26: #{tpu_custom_call.1} parent=1 // pred_check
      _
    $region27: #{tpu_custom_call.1} parent=1 // pred_check_branch
      %78 = sbr.rel (0) target = $region29
    $region28: #{tpu_custom_call.1} parent=1 // pred_region
      %80 = dma.done [#allocation4], 256
    $region29: #{tpu_custom_call.1} parent=1 // pred_fallthru
      _
    // Predicated region
    $region30: #{tpu_custom_call.1} parent=1 // pred_check
      _
    $region31: #{tpu_custom_call.1} parent=1 // pred_check_branch
      %82 = sbr.rel (0) target = $region33
    $region32: #{tpu_custom_call.1} parent=1 // pred_region
      _
    $region33: #{tpu_custom_call.1} parent=1 // pred_fallthru
      _
    %83 = vsyncpa [#allocation3], 1
    %84 = vsyncpa [#allocation4], 1

</llo_original>
